<compile_context>
chip_gen: v5e
topology: v5e:2x2
jax: 0.10.0
libtpu: 0.0.40
codegen_flags: <defaults>
</compile_context>

<pallas_src>
import functools

import jax
import jax.numpy as jnp
from jax.experimental import pallas as pl
from jax.experimental.pallas import tpu as pltpu

LANE = 128                        # vreg lane width; last dim of the streaming slab
_VMEM_LIMIT = 48 * 1024 * 1024    # > double/triple-buffered footprint on all configs, < v7x's 64 MiB


def _chip_config():
    """Per-chip (block_rows, n_tensorcores, core_axis_semantics).

    block_rows is sized so one grid step's HBM transfer dwarfs the ~0.35 us per-step
    pipeline overhead at that chip's HBM bandwidth.
    """
    try:
        kind = jax.devices()[0].device_kind.lower()
    except Exception:
        kind = ""
    if "v7" in kind:        # 2 TC/chip, ~3.2 TB/s per TC: big blocks + explicit core split
        return 8192, 2, getattr(pltpu, "CORE_PARALLEL", pltpu.PARALLEL)
    if "v6" in kind:        # 1 TC, ~1.4 TB/s
        return 4096, 1, pltpu.ARBITRARY
    if "lite" in kind or "v5e" in kind:   # v5e: 1 TC, ~0.82 TB/s: 1 MiB blocks already ~roofline
        return 2048, 1, pltpu.ARBITRARY
    if "v4" in kind or "v5" in kind:      # v4 / v5p megacore: "parallel" shards across the 2 TCs
        return 4096, 2, pltpu.PARALLEL
    return 2048, 1, pltpu.ARBITRARY


def _partial_sum_kernel(x_ref, y_ref, out_ref, acc_ref, *,
                        squared, rows, tm, bpc, full_blocks,
                        groups, acc_rows, has_edge):
    """Per-core partial sum of |x-y| or (x-y)^2 into an (acc_rows, LANE) accumulator."""
    c = pl.program_id(0)
    i = pl.program_id(1)
    gb = c * bpc + i            # global block index (may run past the real block count)

    @pl.when(i == 0)
    def _():
        acc_ref[...] = jnp.zeros_like(acc_ref)

    def accumulate(masked):
        x = x_ref[...].astype(jnp.float32)
        y = y_ref[...].astype(jnp.float32)
        if masked:
            # Zero the inputs past the real extent *before* any arithmetic so the
            # stale VMEM in the out-of-bounds part of an edge / clamped-duplicate
            # block can never poison the accumulator.
            row = jax.lax.broadcasted_iota(jnp.int32, (tm, LANE), 0) + gb * tm
            keep = row < rows
            x = jnp.where(keep, x, 0.0)
            y = jnp.where(keep, y, 0.0)
        d = x - y
        v = d * d if squared else jnp.abs(d)
        # (tm,LANE)->(groups,acc_rows,LANE) only splits the sublane dim (free);
        # sum(axis=0) is vreg-to-vreg VPU adds - no block-sized acc RMW, no XLU work.
        acc_ref[...] += v.reshape(groups, acc_rows, LANE).sum(axis=0)

    if has_edge:
        @pl.when(gb < full_blocks)
        def _():
            accumulate(masked=False)

        @pl.when(gb >= full_blocks)
        def _():
            accumulate(masked=True)
    else:
        accumulate(masked=False)

    @pl.when(i == bpc - 1)
    def _():
        out_ref[...] = acc_ref[...][None]


def _elementwise_loss_kernel(x_ref, y_ref, out_ref, *, squared):
    """reduction='none': per-element |x-y| or (x-y)^2, f32 math, streamed block by block."""
    d = x_ref[...].astype(jnp.float32) - y_ref[...].astype(jnp.float32)
    out_ref[...] = (d * d if squared else jnp.abs(d)).astype(out_ref.dtype)


def _as_lane_slabs(gt, pred):
    """View both inputs as lane-dense (rows, 128) slabs. Aligned sizes: zero-copy reshape."""
    n = gt.size
    x = gt.reshape(-1)
    y = pred.reshape(-1)
    rem = n % LANE
    padded = rem != 0
    if padded:
        # TODO(synk): rare lane-unaligned sizes still take one small pad copy per input;
        # the common aligned case is a pure (free) reshape.
        x = jnp.pad(x, (0, LANE - rem))
        y = jnp.pad(y, (0, LANE - rem))
    rows = x.size // LANE
    return x.reshape(rows, LANE), y.reshape(rows, LANE), n, rows, padded


def restruction_loss(gt, pred, distance="l1", reduction="mean"):
    """JAX/Pallas equivalent of RestructionLoss(distance, reduction)(gt, pred)."""
    assert gt.shape == pred.shape
    if distance == "l1":
        squared = False
    elif distance == "mse":
        squared = True
    else:
        # TODO(synk): perceptual / perceptual_lpips need pretrained VGG16 / LPIPS weights.
        raise NotImplementedError(f"distance={distance!r} not supported in Pallas port")

    block_rows, ncores, core_sem = _chip_config()
    x2d, y2d, n, rows, padded = _as_lane_slabs(gt, pred)
    itemsize = gt.dtype.itemsize

    tm = rows if rows <= block_rows else block_rows     # rows<=block_rows -> single full block
    total_blocks = pl.cdiv(rows, tm)
    bpc = pl.cdiv(total_blocks, ncores)                 # blocks per core
    in_idx = lambda c, i: (jnp.minimum(c * bpc + i, total_blocks - 1), 0)

    if reduction in ("mean", "elementwise_mean", "sum"):
        full_blocks = rows // tm                        # blocks with no ragged row tail
        acc_rows = 8 if tm % 8 == 0 else tm             # tiny inputs: fall back to tm rows
        groups = tm // acc_rows

        partials = pl.pallas_call(
            functools.partial(
                _partial_sum_kernel, squared=squared, rows=rows, tm=tm, bpc=bpc,
                full_blocks=full_blocks, groups=groups, acc_rows=acc_rows,
                has_edge=(full_blocks < ncores * bpc)),
            out_shape=jax.ShapeDtypeStruct((ncores, acc_rows, LANE), jnp.float32),
            grid_spec=pltpu.PrefetchScalarGridSpec(
                num_scalar_prefetch=0,
                grid=(ncores, bpc),
                in_specs=[pl.BlockSpec((tm, LANE), in_idx),
                          pl.BlockSpec((tm, LANE), in_idx)],
                out_specs=pl.BlockSpec((1, acc_rows, LANE), lambda c, i: (c, 0, 0)),
                scratch_shapes=[pltpu.VMEM((acc_rows, LANE), jnp.float32)],
            ),
            compiler_params=pltpu.CompilerParams(
                dimension_semantics=(core_sem, pltpu.ARBITRARY),
                vmem_limit_bytes=_VMEM_LIMIT),
            cost_estimate=pl.CostEstimate(
                flops=3 * n, transcendentals=0, bytes_accessed=2 * n * itemsize),
        )(x2d, y2d)

        total = jnp.sum(partials)           # tiny (ncores*acc_rows*128) finalize reduce on host
        if reduction == "sum":
            return total.astype(gt.dtype)
        # Note: n promoted to f32 for the divide; exact up to 2^24 elements, negligible beyond.
        return (total / n).astype(gt.dtype)

    elif reduction == "none":
        out2d = pl.pallas_call(
            functools.partial(_elementwise_loss_kernel, squared=squared),
            out_shape=jax.ShapeDtypeStruct((rows, LANE), gt.dtype),
            grid_spec=pltpu.PrefetchScalarGridSpec(
                num_scalar_prefetch=0,
                grid=(ncores, bpc),
                in_specs=[pl.BlockSpec((tm, LANE), in_idx),
                          pl.BlockSpec((tm, LANE), in_idx)],
                out_specs=pl.BlockSpec((tm, LANE), in_idx),
            ),
            compiler_params=pltpu.CompilerParams(
                dimension_semantics=(core_sem, pltpu.ARBITRARY),
                vmem_limit_bytes=_VMEM_LIMIT),
            cost_estimate=pl.CostEstimate(
                flops=2 * n, transcendentals=0, bytes_accessed=3 * n * itemsize),
        )(x2d, y2d)
        flat = out2d.reshape(-1)
        if padded:
            flat = flat[:n]                 # only for the rare lane-unaligned fallback
        return flat.reshape(gt.shape)

    else:
        raise NotImplementedError(f"reduction={reduction!r}")


if __name__ == "__main__":
    key = jax.random.PRNGKey(0)
    k1, k2, k3, k4 = jax.random.split(key, 4)

    # Small NCHW inputs, consistent with an image reconstruction loss.
    gt = jax.random.normal(k1, (2, 4, 16, 16), dtype=jnp.float32)
    pred = jax.random.normal(k2, (2, 4, 16, 16), dtype=jnp.float32)

    l1_mean = restruction_loss(gt, pred, distance="l1", reduction="mean")
    mse_mean = restruction_loss(gt, pred, distance="mse", reduction="mean")
    l1_sum = restruction_loss(gt, pred, distance="l1", reduction="sum")
    l1_none = restruction_loss(gt, pred, distance="l1", reduction="none")
    jax.block_until_ready((l1_mean, mse_mean, l1_sum, l1_none))

    # Pure-JAX reference checks (PyTorch L1Loss / MSELoss semantics).
    assert jnp.allclose(l1_mean, jnp.mean(jnp.abs(gt - pred)), rtol=1e-5, atol=1e-6)
    assert jnp.allclose(mse_mean, jnp.mean((gt - pred) ** 2), rtol=1e-5, atol=1e-6)
    assert jnp.allclose(l1_sum, jnp.sum(jnp.abs(gt - pred)), rtol=1e-5, atol=1e-3)
    assert jnp.allclose(l1_none, jnp.abs(gt - pred), atol=1e-6)

    # Medium ragged case: multi-block grid + masked tail block (rows = 5040).
    gt2 = jax.random.normal(k3, (2, 4, 420, 192), dtype=jnp.float32)
    pred2 = jax.random.normal(k4, (2, 4, 420, 192), dtype=jnp.float32)
    mse2 = restruction_loss(gt2, pred2, distance="mse", reduction="mean")
    l1n2 = restruction_loss(gt2, pred2, distance="l1", reduction="none")
    jax.block_until_ready((mse2, l1n2))
    assert jnp.allclose(mse2, jnp.mean((gt2 - pred2) ** 2), rtol=1e-4, atol=1e-5)
    assert jnp.allclose(l1n2, jnp.abs(gt2 - pred2), atol=1e-6)

    # Lane-unaligned fallback (size % 128 != 0) exercising the pad path.
    k5, k6 = jax.random.split(k4)
    gt3 = jax.random.normal(k5, (2, 3, 7, 11), dtype=jnp.float32)
    pred3 = jax.random.normal(k6, (2, 3, 7, 11), dtype=jnp.float32)
    l1m3 = restruction_loss(gt3, pred3, distance="l1", reduction="mean")
    msen3 = restruction_loss(gt3, pred3, distance="mse", reduction="none")
    jax.block_until_ready((l1m3, msen3))
    assert jnp.allclose(l1m3, jnp.mean(jnp.abs(gt3 - pred3)), rtol=1e-5, atol=1e-6)
    assert jnp.allclose(msen3, (gt3 - pred3) ** 2, atol=1e-6)

    print("KERNEL_OK")
</pallas_src>

<mosaic_0001>
module attributes {stable_mosaic.version = 11 : i64} {
  func.func @_partial_sum_kernel(%arg0: i32, %arg1: i32, %arg2: memref<16x128xf32, #tpu.memory_space<vmem>>, %arg3: memref<16x128xf32, #tpu.memory_space<vmem>>, %arg4: memref<1x8x128xf32, #tpu.memory_space<vmem>>, %arg5: memref<8x128xf32, #tpu.memory_space<vmem>>) attributes {dimension_semantics = [#tpu.dimension_semantics<arbitrary>, #tpu.dimension_semantics<arbitrary>], iteration_bounds = array<i64: 1, 1>, scalar_prefetch = 0 : i64, scratch_operands = 1 : i64, tpu.core_type = #tpu.core_type<tc>, window_params = [{transform_indices = @transform_0, window_bounds = array<i64: 16, 128>}, {transform_indices = @transform_1, window_bounds = array<i64: 16, 128>}, {transform_indices = @transform_2, window_bounds = array<i64: 1, 8, 128>}]} {
    %c0_i32 = arith.constant 0 : i32
    %0 = arith.cmpi eq, %arg1, %c0_i32 : i32
    %1 = arith.extui %0 : i1 to i32
    %c0_i32_0 = arith.constant 0 : i32
    %2 = arith.cmpi ne, %1, %c0_i32_0 : i32
    scf.if %2 {
      %cst_10 = arith.constant 0.000000e+00 : f32
      %15 = vector.broadcast %cst_10 : f32 to vector<8x128xf32>
      %c0_11 = arith.constant 0 : index
      %c0_12 = arith.constant 0 : index
      %16 = vector.load %arg5[%c0_11, %c0_12] : memref<8x128xf32, #tpu.memory_space<vmem>>, vector<8x128xf32>
      tpu.vector_store %arg5[%c0_11, %c0_12], %15 {strides = array<i32>} : memref<8x128xf32, #tpu.memory_space<vmem>>, vector<8x128xf32>,
    } else {
    }
    %c0 = arith.constant 0 : index
    %c0_1 = arith.constant 0 : index
    %3 = vector.load %arg2[%c0, %c0_1] : memref<16x128xf32, #tpu.memory_space<vmem>>, vector<16x128xf32>
    %c0_2 = arith.constant 0 : index
    %c0_3 = arith.constant 0 : index
    %4 = vector.load %arg3[%c0_2, %c0_3] : memref<16x128xf32, #tpu.memory_space<vmem>>, vector<16x128xf32>
    %5 = arith.subf %3, %4 : vector<16x128xf32>
    %6 = math.absf %5 : vector<16x128xf32>
    %c0_4 = arith.constant 0 : index
    %c0_5 = arith.constant 0 : index
    %7 = vector.load %arg5[%c0_4, %c0_5] : memref<8x128xf32, #tpu.memory_space<vmem>>, vector<8x128xf32>
    %8 = vector.shape_cast %6 : vector<16x128xf32> to vector<2x8x128xf32>
    %cst = arith.constant dense<0.000000e+00> : vector<8x128xf32>
    %9 = vector.multi_reduction <add>, %8, %cst [0] : vector<2x8x128xf32> to vector<8x128xf32>
    %10 = arith.addf %7, %9 : vector<8x128xf32>
    %c0_6 = arith.constant 0 : index
    %c0_7 = arith.constant 0 : index
    %11 = vector.load %arg5[%c0_6, %c0_7] : memref<8x128xf32, #tpu.memory_space<vmem>>, vector<8x128xf32>
    tpu.vector_store %arg5[%c0_6, %c0_7], %10 {strides = array<i32>} : memref<8x128xf32, #tpu.memory_space<vmem>>, vector<8x128xf32>,
    %c0_i32_8 = arith.constant 0 : i32
    %12 = arith.cmpi eq, %arg1, %c0_i32_8 : i32
    %13 = arith.extui %12 : i1 to i32
    %c0_i32_9 = arith.constant 0 : i32
    %14 = arith.cmpi ne, %13, %c0_i32_9 : i32
    scf.if %14 {
      %c0_10 = arith.constant 0 : index
      %c0_11 = arith.constant 0 : index
      %15 = vector.load %arg5[%c0_10, %c0_11] : memref<8x128xf32, #tpu.memory_space<vmem>>, vector<8x128xf32>
      %16 = vector.shape_cast %15 : vector<8x128xf32> to vector<1x8x128xf32>
      %c0_12 = arith.constant 0 : index
      %c0_13 = arith.constant 0 : index
      %c0_14 = arith.constant 0 : index
      %17 = vector.load %arg4[%c0_12, %c0_13, %c0_14] : memref<1x8x128xf32, #tpu.memory_space<vmem>>, vector<1x8x128xf32>
      tpu.vector_store %arg4[%c0_12, %c0_13, %c0_14], %16 {strides = array<i32>} : memref<1x8x128xf32, #tpu.memory_space<vmem>>, vector<1x8x128xf32>,
    } else {
    }
    return
  }
  func.func @transform_0(%arg0: i32, %arg1: i32) -> (i32, i32) {
    %c1_i32 = arith.constant 1 : i32
    %0 = arith.muli %arg0, %c1_i32 : i32
    %1 = arith.addi %0, %arg1 : i32
    %c0_i32 = arith.constant 0 : i32
    %2 = arith.minsi %1, %c0_i32 : i32
    %c0_i32_0 = arith.constant 0 : i32
    %c0_i32_1 = arith.constant 0 : i32
    return %2, %c0_i32_0 : i32, i32
  }
  func.func @transform_1(%arg0: i32, %arg1: i32) -> (i32, i32) {
    %c1_i32 = arith.constant 1 : i32
    %0 = arith.muli %arg0, %c1_i32 : i32
    %1 = arith.addi %0, %arg1 : i32
    %c0_i32 = arith.constant 0 : i32
    %2 = arith.minsi %1, %c0_i32 : i32
    %c0_i32_0 = arith.constant 0 : i32
    %c0_i32_1 = arith.constant 0 : i32
    return %2, %c0_i32_0 : i32, i32
  }
  func.func @transform_2(%arg0: i32, %arg1: i32) -> (i32, i32, i32) {
    %c0_i32 = arith.constant 0 : i32
    %c0_i32_0 = arith.constant 0 : i32
    %c0_i32_1 = arith.constant 0 : i32
    return %arg0, %c0_i32, %c0_i32_0 : i32, i32, i32
  }
}

</mosaic_0001>

<llo_original>
// kernel: tpu_custom_call.1
$region0: #{tpu_custom_call.1}
  #allocation0 [shape = 'u32[]', space=smem, size = 0x4, offset = 0x4, fixed_abs, tag = 'smem constant byte address 0x4 - core index']
  #allocation1 [shape = 'u32[72,128]{1,0:T(1,128)}', space=vmem, size = 0x9000, scoped, tag = 'internal scratch']
  #allocation2 [shape = 'f32[8,128]{1,0:T(8,128)}', space=vmem, size = 0x1000, scoped, tag = 'scratch operand']
  %s0 = inlined_call_operand.hbm [shape: f32[16,128], index: 0, kind: input, shape index: {}]
  %s1 = inlined_call_operand.hbm [shape: f32[16,128], index: 1, kind: input, shape index: {}]
  %s2 = inlined_call_operand.hbm [shape: f32[1,8,128], index: 2, kind: output, shape index: {}]
  %s3 = sld [smem:[#allocation0]]
  $region34: #{tpu_custom_call.1} parent=0
    _
  %s5 = ssub.s32 1, %s3
  %s6 = scalar_select 0, %s5, %s3
  $region1: #{tpu_custom_call.1} parent=0
    #allocation3 [shape = 'u8[8192]{0}', space=vmem, size = 0x2000, scoped, tag = 'input window, operand 0, single buffered']
    #allocation4 [shape = 's32[1]{0}', space=sflag, size = 0x4, scoped, tag = 'scoped memory for tpu_custom_call.1']
    #allocation5 [shape = 's32[1]{0}', space=sflag, size = 0x4, scoped, tag = 'scoped memory for tpu_custom_call.1']
    #allocation6 [shape = 'u8[8192]{0}', space=vmem, size = 0x2000, scoped, tag = 'input window, operand 1, single buffered']
    #allocation7 [shape = 's32[1]{0}', space=sflag, size = 0x4, scoped, tag = 'scoped memory for tpu_custom_call.1']
    #allocation8 [shape = 'u8[4096]{0}', space=vmem, size = 0x1000, scoped, tag = 'output window, operand 0, single buffered']
    %7 = vsyncpa [#allocation4], 0
    %8 = vsyncpa [#allocation7], 0
    %9 = vsyncpa [#allocation5], 0
    // Predicated region
    $region2: #{tpu_custom_call.1} parent=1 // pred_check
      _
    $region3: #{tpu_custom_call.1} parent=1 // pred_check_branch
      %11 = sbr.rel (0) target = $region5
    $region4: #{tpu_custom_call.1} parent=1 // pred_region
      %s12 = sadd.s32 0, 0
      %p13 = scmp.lt.s32.totalorder %s12, 0
      %s14 = scalar_select %p13, %s12, 0
      %s15 = smul.u32 2, %s14
      %17 = vsyncadd [#allocation4], 0
      %s18 = smul.addr %s15, 8
      %s19 = scalar_lea.hbm %s0, %s18
      %s20 = sshll.u32 %s19, 4
      %s21 = int_to_ptr.hbm [resolvable:$true] %s20
      %s22 = sshll.u32 [#allocation3], 4
      %s23 = int_to_ptr.vmem [resolvable:$true] %s22
      %28 = dma.hbm_to_vmem [thread:$0]  %s21, 256, %s23, [#allocation4], 128, 128, 8
    $region5: #{tpu_custom_call.1} parent=1 // pred_fallthru
      _
    // Predicated region
    $region6: #{tpu_custom_call.1} parent=1 // pred_check
      _
    $region7: #{tpu_custom_call.1} parent=1 // pred_check_branch
      %30 = sbr.rel (0) target = $region9
    $region8: #{tpu_custom_call.1} parent=1 // pred_region
      %s31 = sadd.s32 0, 0
      %p32 = scmp.lt.s32.totalorder %s31, 0
      %s33 = scalar_select %p32, %s31, 0
      %s34 = smul.u32 2, %s33
      %36 = vsyncadd [#allocation7], 0
      %s37 = smul.addr %s34, 8
      %s38 = scalar_lea.hbm %s1, %s37
      %s39 = sshll.u32 %s38, 4
      %s40 = int_to_ptr.hbm [resolvable:$true] %s39
      %s41 = sshll.u32 [#allocation6], 4
      %s42 = int_to_ptr.vmem [resolvable:$true] %s41
      %47 = dma.hbm_to_vmem [thread:$0]  %s40, 256, %s42, [#allocation7], 128, 128, 8
    $region9: #{tpu_custom_call.1} parent=1 // pred_fallthru
      _
    // Predicated region
    $region10: #{tpu_custom_call.1} parent=1 // pred_check
      _
    $region11: #{tpu_custom_call.1} parent=1 // pred_check_branch
      %49 = sbr.rel (0) target = $region13
    $region12: #{tpu_custom_call.1} parent=1 // pred_region
      %51 = dma.done [#allocation4], 256
    $region13: #{tpu_custom_call.1} parent=1 // pred_fallthru
      _
    // Predicated region
    $region14: #{tpu_custom_call.1} parent=1 // pred_check
      _
    $region15: #{tpu_custom_call.1} parent=1 // pred_check_branch
      %53 = sbr.rel (0) target = $region17
    $region16: #{tpu_custom_call.1} parent=1 // pred_region
      %55 = dma.done [#allocation7], 256
    $region17: #{tpu_custom_call.1} parent=1 // pred_fallthru
      _
    %s56 = sadd.s32 0, 0
    %p57 = scmp.lt.s32.totalorder %s56, 0
    %s58 = scalar_select %p57, %s56, 0
    %s59 = smul.u32 2, %s58
    %s60 = sadd.s32 0, 0
    %p61 = scmp.lt.s32.totalorder %s60, 0
    %s62 = scalar_select %p61, %s60, 0
    %s63 = smul.u32 2, %s62
    %p64 = scmp.eq.s32.totalorder 0, 0
    // Predicated region
    $region18: #{tpu_custom_call.1} parent=1 // pred_check
      %p65 = pneg %p64
    $region19: #{tpu_custom_call.1} parent=1 // pred_check_branch
      %67 = sbr.rel (%p65) target = $region21
    $region20: #{tpu_custom_call.1} parent=1 // pred_region
      %68 = vst [vmem:[#allocation2] sm:$0xff] 0.0
    $region21: #{tpu_custom_call.1} parent=1 // pred_fallthru
      _
    %v69 = vld [vmem:[#allocation3] sm:$0xff]
    %v70 = vld [vmem:[#allocation3 + $0x8] sm:$0xff]
    %v71 = vld [vmem:[#allocation6] sm:$0xff]
    %v72 = vld [vmem:[#allocation6 + $0x8] sm:$0xff]
    %v73 = vsub.f32 %v69, %v71
    %v74 = vsub.f32 %v70, %v72
    %v75 = vand.u32 2147483647, %v73
    %v76 = vand.u32 2147483647, %v74
    %v77 = vld [vmem:[#allocation2] sm:$0xff]
    %v78 = vadd.f32 %v75, %v76
    %v79 = vadd.f32 %v77, %v78
    %80 = vst [vmem:[#allocation2] sm:$0xff] %v79
    // Predicated region
    $region22: #{tpu_custom_call.1} parent=1 // pred_check
      %p81 = pneg %p64
    $region23: #{tpu_custom_call.1} parent=1 // pred_check_branch
      %83 = sbr.rel (%p81) target = $region25
    $region24: #{tpu_custom_call.1} parent=1 // pred_region
      %v84 = vld [vmem:[#allocation2] sm:$0xff]
      %85 = vst [vmem:[#allocation8] sm:$0xff] %v84
    $region25: #{tpu_custom_call.1} parent=1 // pred_fallthru
      _
    // Predicated region
    $region26: #{tpu_custom_call.1} parent=1 // pred_check
      _
    $region27: #{tpu_custom_call.1} parent=1 // pred_check_branch
      %87 = sbr.rel (0) target = $region29
    $region28: #{tpu_custom_call.1} parent=1 // pred_region
      %89 = vsyncadd [#allocation5], 0
      %s91 = sshll.u32 [#allocation8], 4
      %s92 = int_to_ptr.vmem [resolvable:$true] %s91
      %s93 = sshll.u32 %s2, 4
      %s94 = int_to_ptr.hbm [resolvable:$true] %s93
      %96 = dma.vmem_to_hbm [thread:$0]  %s92, 128, %s94, [#allocation5]
    $region29: #{tpu_custom_call.1} parent=1 // pred_fallthru
      _
    // Predicated region
    $region30: #{tpu_custom_call.1} parent=1 // pred_check
      _
    $region31: #{tpu_custom_call.1} parent=1 // pred_check_branch
      %98 = sbr.rel (0) target = $region33
    $region32: #{tpu_custom_call.1} parent=1 // pred_region
      %100 = dma.done [#allocation5], 128
    $region33: #{tpu_custom_call.1} parent=1 // pred_fallthru
      _
    %101 = vsyncpa [#allocation4], 1
    %102 = vsyncpa [#allocation7], 1
    %103 = vsyncpa [#allocation5], 1

</llo_original>
